<compile_context>
chip_gen: v7x
topology: tpu7x:2x2x1
jax: 0.10.0
libtpu: 0.0.40
codegen_flags: <defaults>
</compile_context>

<pallas_src>
import math
import functools

import jax
import jax.numpy as jnp
from jax.experimental import pallas as pl
from jax.experimental.pallas import tpu as pltpu


_SINGLE_BUFFER_WEIGHTS = hasattr(pl, "Buffered")


# ----------------------------------------------------------------------------
# In-kernel helpers
# ----------------------------------------------------------------------------
def _layernorm(x, gamma, beta, eps):
    # PyTorch nn.LayerNorm: biased variance over the last dim.
    mean = jnp.mean(x, axis=-1, keepdims=True)
    var = jnp.mean(jnp.square(x - mean), axis=-1, keepdims=True)
    return (x - mean) * jax.lax.rsqrt(var + eps) * gamma + beta


def _gelu_exact(x):
    # nn.GELU() default = exact erf-based GELU.
    return 0.5 * x * (1.0 + jax.lax.erf(x * (1.0 / math.sqrt(2.0))))


def _softmax_lastdim(x):
    x = x - jnp.max(x, axis=-1, keepdims=True)
    e = jnp.exp(x)
    return e * pl.reciprocal(jnp.sum(e, axis=-1, keepdims=True), approx=True)


@functools.lru_cache(maxsize=None)
def _vmem_limit_bytes():
    cap = 128 * 1024 * 1024
    try:
        cap = int(pltpu.get_tpu_info().vmem_capacity_bytes)
    except Exception:
        pass
    # ~100 MiB on 128-MiB parts (v5e/v6e), ~54 MiB on 64-MiB parts (v7x).
    return min(100 * 1024 * 1024, int(cap * 0.85))


# ----------------------------------------------------------------------------
# Kernels
# ----------------------------------------------------------------------------
def embed_ln_kernel(emb_ref, g_ref, b_ref, o_ref):
    # Embeddings.layer_norm has eps=1e-12; dropout is identity (eval).
    o_ref[...] = _layernorm(emb_ref[...], g_ref[...], b_ref[...], 1e-12)


def decoder_layer_kernel(xf_ref, xt_ref, valid_ref,
                         ln1g_ref, ln1b_ref,
                         wqv_ref, bqv_ref, wk_ref, bk_ref,
                         wo_ref, bo_ref,
                         ln2g_ref, ln2b_ref,
                         w1_ref, b1_ref, w2_ref, b2_ref,
                         o_ref, *, num_heads, tq):
    x_full = xf_ref[...]                  # (S, D) f32 -- full seq (score columns / values)
    x_tile = xt_ref[...]                  # (tq, D) f32 -- query-tile rows (output rows)
    S, D = x_full.shape
    hd = D // num_heads
    scale = 1.0 / math.sqrt(hd)
    row0 = pl.program_id(1) * tq

    # Causal + padding mask rebuilt in-kernel from the (1, S) validity vector
    # (avoids DMA'ing a (B, S, S) f32 mask from HBM every layer).
    rows = row0 + jax.lax.broadcasted_iota(jnp.int32, (tq, S), 0)
    cols = jax.lax.broadcasted_iota(jnp.int32, (tq, S), 1)
    keep = (cols <= rows) & (valid_ref[...] > 0.0)              # (tq, S)

    # ---- self-attention sublayer -------------------------------------------
    xn_full = _layernorm(x_full, ln1g_ref[...], ln1b_ref[...], 1e-5).astype(jnp.bfloat16)
    xn_tile = _layernorm(x_tile, ln1g_ref[...], ln1b_ref[...], 1e-5).astype(jnp.bfloat16)

    # Fused Q/V projection over the full sequence (one wide bf16 MXU matmul,
    # f32 accumulation); K projection only for the tile rows.
    qv = (jnp.dot(xn_full, wqv_ref[...],
                  preferred_element_type=jnp.float32) + bqv_ref[...])   # (S, 2D)
    q_full = qv[:, :D].astype(jnp.bfloat16)                             # (S, D)
    v_full = qv[:, D:].astype(jnp.bfloat16)                             # (S, D)
    k_tile = (jnp.dot(xn_tile, wk_ref[...],
                      preferred_element_type=jnp.float32)
              + bk_ref[...]).astype(jnp.bfloat16)                       # (tq, D)

    def split_heads(t):                   # (n, D) -> (H, n, hd)
        return jnp.concatenate(
            [t[None, :, h * hd:(h + 1) * hd] for h in range(num_heads)], axis=0)

    q_h = split_heads(q_full)             # (H, S, hd)
    v_h = split_heads(v_full)             # (H, S, hd)
    k_h = split_heads(k_tile)             # (H, tq, hd)

    # Reference quirk: scores = K(x) @ Q(x)^T / sqrt(head_dim).
    scores = jnp.einsum('hid,hjd->hij', k_h, q_h,
                        preferred_element_type=jnp.float32) * scale     # (H, tq, S)
    scores = jnp.where(keep[None], scores, -1000000000.0)
    probs = _softmax_lastdim(scores).astype(jnp.bfloat16)               # (H, tq, S)
    attn = jnp.einsum('hij,hjd->hid', probs, v_h,
                      preferred_element_type=jnp.float32)               # (H, tq, hd)

    # Output projection: accumulate each head's (tq,hd)@(hd,D) directly into a
    # single (tq, D) f32 accumulator -- no (H, tq, D) intermediate.
    attn_out = jnp.zeros((tq, D), jnp.float32)
    for h in range(num_heads):
        attn_out = attn_out + jnp.dot(attn[h].astype(jnp.bfloat16), wo_ref[h],
                                      preferred_element_type=jnp.float32)
    attn_out = attn_out + bo_ref[...]

    x1 = x_tile + attn_out

    # ---- feed-forward sublayer ---------------------------------------------
    # TODO(synk): tile W1/W2 over F (pl.when accumulator) for v7x-sized models.
    xn2 = _layernorm(x1, ln2g_ref[...], ln2b_ref[...], 1e-5)
    h1 = (jnp.dot(xn2.astype(jnp.bfloat16), w1_ref[...],
                  preferred_element_type=jnp.float32) + b1_ref[...])
    h1 = _gelu_exact(h1)
    h2 = (jnp.dot(h1.astype(jnp.bfloat16), w2_ref[...],
                  preferred_element_type=jnp.float32) + b2_ref[...])
    # FeedForward dropout (dr=0.9) is identity in eval mode.
    o_ref[...] = x1 + h2


def final_fc_kernel(x_ref, w_ref, b_ref, o_ref):
    # fc: (S, D) @ (D, tV) + b ; final dropout is identity in eval mode.
    # x arrives already cast to bf16 (halves its DMA; no per-tile VPU cast).
    o_ref[...] = (jnp.dot(x_ref[...], w_ref[...],
                          preferred_element_type=jnp.float32) + b_ref[...])


# ----------------------------------------------------------------------------
# Tiling helpers
# ----------------------------------------------------------------------------
def _pick_query_tile(S, pref=256):
    # Query-row tile: multiple of 8 (sublane), 256-aligned where possible for
    # the v6e/v7x 256x256 MXU; full S for short sequences.
    if S <= pref:
        return S
    for t in (pref, 128, 64, 32, 16, 8):
        if S % t == 0:
            return t
    return S


def _pick_vocab_tile(V, pref=1024):
    # Lane-dense vocab tiles (multiple of 128); 1024 keeps the double-buffered
    # (S, tV) f32 output block within budget on v5e.
    if V % 128 == 0 and V > pref:
        t = pref
        while V % t != 0:
            t -= 128
        return max(t, 128)
    return V


# ----------------------------------------------------------------------------
# Pallas-call wrappers
# ----------------------------------------------------------------------------
def embed_layernorm(emb, gamma, beta):
    B, S, D = emb.shape
    return pl.pallas_call(
        embed_ln_kernel,
        out_shape=jax.ShapeDtypeStruct((B, S, D), jnp.float32),
        grid=(B,),
        in_specs=[pl.BlockSpec((None, S, D), lambda b: (b, 0, 0)),
                  pl.BlockSpec((1, D), lambda b: (0, 0)),
                  pl.BlockSpec((1, D), lambda b: (0, 0))],
        out_specs=pl.BlockSpec((None, S, D), lambda b: (b, 0, 0)),
        compiler_params=pltpu.CompilerParams(
            dimension_semantics=("parallel",),
            vmem_limit_bytes=_vmem_limit_bytes()),
    )(emb, gamma, beta)


def decoder_layer(x, valid, p, num_heads, *, single_buffer=True):
    B, S, D = x.shape
    F = p["w1"].shape[1]
    hd = D // num_heads
    tq = _pick_query_tile(S)
    nQ = S // tq
    kernel = functools.partial(decoder_layer_kernel, num_heads=num_heads, tq=tq)

    if single_buffer:
        def _c(shape):
            # Constant weight/bias operand: same block every step, and only a
            # single resident buffer (default double-buffering is wasted VMEM).
            return pl.BlockSpec(shape, lambda b, q: (0,) * len(shape),
                                pipeline_mode=pl.Buffered(buffer_count=1))
    else:
        def _c(shape):
            return pl.BlockSpec(shape, lambda b, q: (0,) * len(shape))

    in_specs = [
        pl.BlockSpec((None, S, D), lambda b, q: (b, 0, 0)),    # x, full seq
        pl.BlockSpec((None, tq, D), lambda b, q: (b, q, 0)),   # x, query tile
        pl.BlockSpec((None, 1, S), lambda b, q: (b, 0, 0)),    # token validity
        _c((1, D)), _c((1, D)),                                # ln1 gamma/beta
        _c((D, 2 * D)), _c((1, 2 * D)),                        # Wqv, bqv
        _c((D, D)), _c((1, D)),                                # Wk, bk
        _c((num_heads, hd, D)), _c((1, D)),                    # Wo per-head, bo
        _c((1, D)), _c((1, D)),                                # ln2 gamma/beta
        _c((D, F)), _c((1, F)),                                # W1, b1
        _c((F, D)), _c((1, D)),                                # W2, b2
    ]
    return pl.pallas_call(
        kernel,
        out_shape=jax.ShapeDtypeStruct((B, S, D), jnp.float32),
        grid=(B, nQ),
        in_specs=in_specs,
        out_specs=pl.BlockSpec((None, tq, D), lambda b, q: (b, q, 0)),
        compiler_params=pltpu.CompilerParams(
            dimension_semantics=("parallel", "parallel"),
            vmem_limit_bytes=_vmem_limit_bytes()),
    )(x, x, valid,
      p["ln1_g"], p["ln1_b"],
      p["wqv"], p["bqv"], p["wk"], p["bk"],
      p["wo"], p["bo"],
      p["ln2_g"], p["ln2_b"],
      p["w1"], p["b1"], p["w2"], p["b2"])


def final_fc(x_bf16, w, b):
    B, S, D = x_bf16.shape
    V = w.shape[1]
    tV = _pick_vocab_tile(V)
    nV = V // tV
    # Vocab is the SLOW grid axis: each (D, tV) weight slab is DMA'd from HBM
    # once and stays resident while the batch blocks stream under it.
    return pl.pallas_call(
        final_fc_kernel,
        out_shape=jax.ShapeDtypeStruct((B, S, V), jnp.float32),
        grid=(nV, B),
        in_specs=[pl.BlockSpec((None, S, D), lambda j, bb: (bb, 0, 0)),
                  pl.BlockSpec((D, tV), lambda j, bb: (0, j)),
                  pl.BlockSpec((1, tV), lambda j, bb: (0, j))],
        out_specs=pl.BlockSpec((None, S, tV), lambda j, bb: (bb, 0, j)),
        compiler_params=pltpu.CompilerParams(
            dimension_semantics=("parallel", "parallel"),
            vmem_limit_bytes=_vmem_limit_bytes()),
    )(x_bf16, w, b)


# ----------------------------------------------------------------------------
# Full model (glue in plain JAX: embedding gather, validity vector)
# ----------------------------------------------------------------------------
def transformer_forward(params, tokens, *, num_heads):
    global _SINGLE_BUFFER_WEIGHTS
    B, S = tokens.shape

    # Only the (B, 1, S) token-validity vector goes to the kernels; the causal
    # mask is rebuilt in-kernel (Transformer.create_causal_mask).
    valid = (tokens != 0).astype(jnp.float32)[:, None, :]       # (B, 1, S)

    # Embeddings (gather + positional add are glue; layernorm is the kernel).
    word_emb = params["word_emb"][tokens]                       # (B, S, D)
    pos_emb = params["pos_emb"][:S][None]                       # (1, S, D)
    x = embed_layernorm(word_emb + pos_emb, params["emb_ln_g"],
                        params["emb_ln_b"])

    for lp in params["layers"]:
        if _SINGLE_BUFFER_WEIGHTS:
            try:
                x = decoder_layer(x, valid, lp, num_heads, single_buffer=True)
                continue
            except Exception:
                # pipeline_mode=pl.Buffered(1) unsupported on this JAX build.
                _SINGLE_BUFFER_WEIGHTS = False
        x = decoder_layer(x, valid, lp, num_heads, single_buffer=False)

    # TODO(synk): optionally carry the residual stream itself in bf16.
    return final_fc(x.astype(jnp.bfloat16), params["fc_w"], params["fc_b"])


# ----------------------------------------------------------------------------
# Deterministic parameter init (shapes follow the PyTorch __init__; weights
# stored pre-transposed as (in, out); Q/V fused as (D, 2D) [cols 0:D=Q, D:2D=V],
# K as (D, D), out-projection per-head as (H, hd, D); matmul weights in bf16).
# ----------------------------------------------------------------------------
def init_params(key, *, vocab, D, H, L, F, max_len):
    hd = D // H
    keys = iter(jax.random.split(key, 8 + 8 * L))

    def nrm(shape, dtype=jnp.float32, scale=0.02):
        return (scale * jax.random.normal(next(keys), shape)).astype(dtype)

    word = nrm((vocab, D)).at[0].set(0.0)     # padding_idx=0 row zeroed
    params = {
        "word_emb": word,
        "pos_emb": nrm((max_len, D)),
        "emb_ln_g": jnp.ones((1, D), jnp.float32),
        "emb_ln_b": jnp.zeros((1, D), jnp.float32),
        "fc_w": nrm((D, vocab), jnp.bfloat16),
        "fc_b": jnp.zeros((1, vocab), jnp.float32),
        "layers": [],
    }
    for _ in range(L):
        params["layers"].append({
            "ln1_g": jnp.ones((1, D), jnp.float32),
            "ln1_b": jnp.zeros((1, D), jnp.float32),
            "wqv": nrm((D, 2 * D), jnp.bfloat16),   # [0:D]=Q, [D:2D]=V
            "bqv": nrm((1, 2 * D)),
            "wk": nrm((D, D), jnp.bfloat16),
            "bk": nrm((1, D)),
            "wo": nrm((H, hd, D), jnp.bfloat16),    # per-head rows of out_linear
            "bo": jnp.zeros((1, D), jnp.float32),
            "ln2_g": jnp.ones((1, D), jnp.float32),
            "ln2_b": jnp.zeros((1, D), jnp.float32),
            "w1": nrm((D, F), jnp.bfloat16),
            "b1": jnp.zeros((1, F), jnp.float32),
            "w2": nrm((F, D), jnp.bfloat16),
            "b2": jnp.zeros((1, D), jnp.float32),
        })
    return params


# ----------------------------------------------------------------------------
if __name__ == "__main__":
    VOCAB, MODEL_DIM, NUM_HEADS, NUM_LAYERS = 32, 32, 4, 2
    FF_DIM, MAX_SEQ_LEN = 64, 16
    BATCH, SEQ = 2, 8

    key = jax.random.PRNGKey(0)
    pkey, tkey = jax.random.split(key)
    params = init_params(pkey, vocab=VOCAB, D=MODEL_DIM, H=NUM_HEADS,
                         L=NUM_LAYERS, F=FF_DIM, max_len=MAX_SEQ_LEN)

    tokens = jax.random.randint(tkey, (BATCH, SEQ), 0, VOCAB, dtype=jnp.int32)
    tokens = tokens.at[:, -1].set(0)   # exercise the padding part of the mask

    preds = transformer_forward(params, tokens, num_heads=NUM_HEADS)
    preds = jax.block_until_ready(preds)

    assert preds.shape == (BATCH, SEQ, VOCAB), preds.shape
    assert bool(jnp.all(jnp.isfinite(preds)))
    print("KERNEL_OK")
</pallas_src>

<mosaic_0001>
module attributes {stable_mosaic.version = 11 : i64} {
  func.func @embed_ln_kernel(%arg0: i32, %arg1: memref<1x8x32xf32, #tpu.memory_space<vmem>>, %arg2: memref<1x32xf32, #tpu.memory_space<vmem>>, %arg3: memref<1x32xf32, #tpu.memory_space<vmem>>, %arg4: memref<1x8x32xf32, #tpu.memory_space<vmem>>) attributes {dimension_semantics = [#tpu.dimension_semantics<parallel>], iteration_bounds = array<i64: 2>, scalar_prefetch = 0 : i64, scratch_operands = 0 : i64, tpu.core_type = #tpu.core_type<tc>, window_params = [{transform_indices = @transform_0, window_bounds = array<i64: 1, 8, 32>}, {pipeline_mode = #tpu.pipeline_mode<synchronous>, transform_indices = @transform_1, window_bounds = array<i64: 1, 32>}, {pipeline_mode = #tpu.pipeline_mode<synchronous>, transform_indices = @transform_2, window_bounds = array<i64: 1, 32>}, {transform_indices = @transform_3, window_bounds = array<i64: 1, 8, 32>}]} {
    %c0 = arith.constant 0 : index
    %c0_0 = arith.constant 0 : index
    %c0_1 = arith.constant 0 : index
    %0 = vector.load %arg1[%c0, %c0_0, %c0_1] : memref<1x8x32xf32, #tpu.memory_space<vmem>>, vector<1x8x32xf32>
    %1 = vector.shape_cast %0 : vector<1x8x32xf32> to vector<8x32xf32>
    %c0_2 = arith.constant 0 : index
    %c0_3 = arith.constant 0 : index
    %2 = vector.load %arg2[%c0_2, %c0_3] : memref<1x32xf32, #tpu.memory_space<vmem>>, vector<1x32xf32>
    %c0_4 = arith.constant 0 : index
    %c0_5 = arith.constant 0 : index
    %3 = vector.load %arg3[%c0_4, %c0_5] : memref<1x32xf32, #tpu.memory_space<vmem>>, vector<1x32xf32>
    %cst = arith.constant dense<0.000000e+00> : vector<8xf32>
    %4 = vector.multi_reduction <add>, %1, %cst [1] : vector<8x32xf32> to vector<8xf32>
    %5 = vector.shape_cast %4 : vector<8xf32> to vector<8x1xf32>
    %cst_6 = arith.constant 3.200000e+01 : f32
    %6 = vector.broadcast %cst_6 : f32 to vector<8x1xf32>
    %7 = arith.divf %5, %6 : vector<8x1xf32>
    %8 = vector.broadcast %7 : vector<8x1xf32> to vector<8x32xf32>
    %9 = arith.subf %1, %8 : vector<8x32xf32>
    %10 = arith.mulf %9, %9 : vector<8x32xf32>
    %cst_7 = arith.constant dense<0.000000e+00> : vector<8xf32>
    %11 = vector.multi_reduction <add>, %10, %cst_7 [1] : vector<8x32xf32> to vector<8xf32>
    %12 = vector.shape_cast %11 : vector<8xf32> to vector<8x1xf32>
    %cst_8 = arith.constant 3.200000e+01 : f32
    %13 = vector.broadcast %cst_8 : f32 to vector<8x1xf32>
    %14 = arith.divf %12, %13 : vector<8x1xf32>
    %15 = vector.broadcast %7 : vector<8x1xf32> to vector<8x32xf32>
    %16 = arith.subf %1, %15 : vector<8x32xf32>
    %cst_9 = arith.constant 9.99999996E-13 : f32
    %17 = vector.broadcast %cst_9 : f32 to vector<8x1xf32>
    %18 = arith.addf %14, %17 : vector<8x1xf32>
    %19 = math.rsqrt %18 : vector<8x1xf32>
    %20 = vector.broadcast %19 : vector<8x1xf32> to vector<8x32xf32>
    %21 = arith.mulf %16, %20 : vector<8x32xf32>
    %22 = vector.broadcast %2 : vector<1x32xf32> to vector<8x32xf32>
    %23 = arith.mulf %21, %22 : vector<8x32xf32>
    %24 = vector.broadcast %3 : vector<1x32xf32> to vector<8x32xf32>
    %25 = arith.addf %23, %24 : vector<8x32xf32>
    %c0_10 = arith.constant 0 : index
    %c0_11 = arith.constant 0 : index
    %c0_12 = arith.constant 0 : index
    %26 = vector.load %arg4[%c0_10, %c0_11, %c0_12] : memref<1x8x32xf32, #tpu.memory_space<vmem>>, vector<1x8x32xf32>
    %27 = vector.shape_cast %26 : vector<1x8x32xf32> to vector<8x32xf32>
    %28 = vector.shape_cast %25 : vector<8x32xf32> to vector<1x8x32xf32>
    tpu.vector_store %arg4[%c0_10, %c0_11, %c0_12], %28 {strides = array<i32>} : memref<1x8x32xf32, #tpu.memory_space<vmem>>, vector<1x8x32xf32>,
    return
  }
  func.func @transform_0(%arg0: i32) -> (i32, i32, i32) {
    %c0_i32 = arith.constant 0 : i32
    %c0_i32_0 = arith.constant 0 : i32
    %c0_i32_1 = arith.constant 0 : i32
    return %arg0, %c0_i32, %c0_i32_0 : i32, i32, i32
  }
  func.func @transform_1(%arg0: i32) -> (i32, i32) {
    %c0_i32 = arith.constant 0 : i32
    %c0_i32_0 = arith.constant 0 : i32
    %c0_i32_1 = arith.constant 0 : i32
    return %c0_i32, %c0_i32_0 : i32, i32
  }
  func.func @transform_2(%arg0: i32) -> (i32, i32) {
    %c0_i32 = arith.constant 0 : i32
    %c0_i32_0 = arith.constant 0 : i32
    %c0_i32_1 = arith.constant 0 : i32
    return %c0_i32, %c0_i32_0 : i32, i32
  }
  func.func @transform_3(%arg0: i32) -> (i32, i32, i32) {
    %c0_i32 = arith.constant 0 : i32
    %c0_i32_0 = arith.constant 0 : i32
    %c0_i32_1 = arith.constant 0 : i32
    return %arg0, %c0_i32, %c0_i32_0 : i32, i32, i32
  }
}

</mosaic_0001>

<llo_original>
// kernel: tpu_custom_call.1
$region0: #{tpu_custom_call.1}
  #allocation0 [shape = 'u32[]', space=smem, size = 0x4, offset = 0x4, fixed_abs, tag = 'smem constant byte address 0x4 - core index']
  #allocation1 [shape = 'u32[144,128]{1,0:T(1,128)}', space=vmem, size = 0x12000, scoped, tag = 'internal scratch']
  %s0 = inlined_call_operand.hbm [shape: f32[2,8,32], index: 0, kind: input, shape index: {}]
  %s1 = inlined_call_operand.hbm [shape: f32[1,32], index: 1, kind: input, shape index: {}]
  %s2 = inlined_call_operand.hbm [shape: f32[1,32], index: 2, kind: input, shape index: {}]
  %s3 = inlined_call_operand.hbm [shape: f32[2,8,32], index: 3, kind: output, shape index: {}]
  %s4 = sld [smem:[#allocation0]]
  $region57: #{tpu_custom_call.1} parent=0
    _
  %s6 = ssub.s32 1, %s4
  %s7 = scalar_select 0, %s6, %s4
  $region1: #{tpu_custom_call.1} parent=0
    #allocation2 [shape = 'u8[8192]{0}', space=vmem, size = 0x2000, scoped, tag = 'input window, operand 0']
    #allocation3 [shape = 's32[2]{0}', space=sflag, size = 0x8, scoped, tag = 'scoped memory for tpu_custom_call.1']
    #allocation4 [shape = 's32[2]{0}', space=sflag, size = 0x8, scoped, tag = 'scoped memory for tpu_custom_call.1']
    #allocation5 [shape = 'u8[512]{0}', space=vmem, size = 0x400, scoped, tag = 'input window, operand 1, single buffered']
    #allocation6 [shape = 's32[1]{0}', space=sflag, size = 0x4, scoped, tag = 'scoped memory for tpu_custom_call.1']
    #allocation7 [shape = 'u8[512]{0}', space=vmem, size = 0x400, scoped, tag = 'input window, operand 2, single buffered']
    #allocation8 [shape = 'u8[8192]{0}', space=vmem, size = 0x2000, scoped, tag = 'output window, operand 0']
    %8 = vsyncpa [#allocation3], 0
    %s9 = scalar_lea.sflag [#allocation3], 1
    %10 = vsyncpa %s9, 0
    %11 = vsyncpa [#allocation6], 0
    %12 = vsyncpa [#allocation4], 0
    %s13 = scalar_lea.sflag [#allocation4], 1
    %14 = vsyncpa %s13, 0
    loop: start=0, step=1, limit=4
    $region2: #{tpu_custom_call.1} parent=1 // loop_pre_header
      _
    $region3: #{tpu_custom_call.1} parent=1 // loop_header
      %s16 = sphi 0, %s20
      %p17 = scmp.ge.s32.totalorder %s16, 4
      %s26 = sphi 0, %s28
      %s29 = sphi 0, %s26
      %s30 = sphi 0, %s29
      %s46 = sphi 0, %s30
      %s50 = sphi 0, %s50
      %s52 = sphi 0, %s50
      %s53 = sphi 0, %s52
      %s67 = sphi 0, %s53
      %s71 = sphi 0, %s71
      %s73 = sphi 0, %s71
      %s74 = sphi 0, %s73
      %s88 = sphi 0, %s74
      %s94 = sphi 0, %s96
      %s97 = sphi 0, %s94
      %s98 = sphi 0, %s97
      %s114 = sphi 0, %s98
    $region4: #{tpu_custom_call.1} parent=1 // loop_header_branch
      %19 = sbr.rel (%p17) target = $region8
    $region5: #{tpu_custom_call.1} parent=1 // loop_body
      %s21 = ssub.s32 %s16, 1
      %s22 = ssub.s32 %s16, 2
      %s23 = sadd.s32 %s16, 1
      %s24 = ssub.s32 %s16, %s23
      %p25 = scmp.eq.s32.totalorder %s24, 0
      %s27 = sadd.s32 %s26, 1
      %s28 = scalar_select %p25, %s26, %s27
      %p31 = pneg %p25
      %p32 = scmp.eq.s32.totalorder %s16, 1
      %p33 = por %p31, %p32
      %p34 = scmp.ne.s32.totalorder %s26, %s29
      %p35 = scmp.eq.s32.totalorder %s16, 0
      %p36 = por %p34, %p35
      %p37 = scmp.ne.s32.totalorder %s26, %s29
      %p38 = scmp.eq.s32.totalorder %s21, 1
      %p39 = por %p37, %p38
      %p40 = scmp.ne.s32.totalorder %s29, %s30
      %p41 = scmp.eq.s32.totalorder %s21, 0
      %p42 = por %p40, %p41
      %p43 = scmp.ne.s32.totalorder %s29, %s30
      %p44 = scmp.eq.s32.totalorder %s22, 1
      %p45 = por %p43, %p44
      %p47 = scmp.ne.s32.totalorder %s30, %s46
      %p48 = scmp.eq.s32.totalorder %s22, 0
      %p49 = por %p47, %p48
      %s51 = sadd.s32 %s50, 1
      %p54 = scmp.eq.s32.totalorder %s16, 1
      %p55 = scmp.ne.s32.totalorder %s50, %s52
      %p56 = scmp.eq.s32.totalorder %s16, 0
      %p57 = por %p55, %p56
      %p58 = scmp.ne.s32.totalorder %s50, %s52
      %p59 = scmp.eq.s32.totalorder %s21, 1
      %p60 = por %p58, %p59
      %p61 = scmp.ne.s32.totalorder %s52, %s53
      %p62 = scmp.eq.s32.totalorder %s21, 0
      %p63 = por %p61, %p62
      %p64 = scmp.ne.s32.totalorder %s52, %s53
      %p65 = scmp.eq.s32.totalorder %s22, 1
      %p66 = por %p64, %p65
      %p68 = scmp.ne.s32.totalorder %s53, %s67
      %p69 = scmp.eq.s32.totalorder %s22, 0
      %p70 = por %p68, %p69
      %s72 = sadd.s32 %s71, 1
      %p75 = scmp.eq.s32.totalorder %s16, 1
      %p76 = scmp.ne.s32.totalorder %s71, %s73
      %p77 = scmp.eq.s32.totalorder %s16, 0
      %p78 = por %p76, %p77
      %p79 = scmp.ne.s32.totalorder %s71, %s73
      %p80 = scmp.eq.s32.totalorder %s21, 1
      %p81 = por %p79, %p80
      %p82 = scmp.ne.s32.totalorder %s73, %s74
      %p83 = scmp.eq.s32.totalorder %s21, 0
      %p84 = por %p82, %p83
      %p85 = scmp.ne.s32.totalorder %s73, %s74
      %p86 = scmp.eq.s32.totalorder %s22, 1
      %p87 = por %p85, %p86
      %p89 = scmp.ne.s32.totalorder %s74, %s88
      %p90 = scmp.eq.s32.totalorder %s22, 0
      %p91 = por %p89, %p90
      %s92 = ssub.s32 %s16, %s23
      %p93 = scmp.eq.s32.totalorder %s92, 0
      %s95 = sadd.s32 %s94, 1
      %s96 = scalar_select %p93, %s94, %s95
      %p99 = pneg %p93
      %p100 = scmp.eq.s32.totalorder %s16, 1
      %p101 = por %p99, %p100
      %p102 = scmp.ne.s32.totalorder %s94, %s97
      %p103 = scmp.eq.s32.totalorder %s16, 0
      %p104 = por %p102, %p103
      %p105 = scmp.ne.s32.totalorder %s94, %s97
      %p106 = scmp.eq.s32.totalorder %s21, 1
      %p107 = por %p105, %p106
      %p108 = scmp.ne.s32.totalorder %s97, %s98
      %p109 = scmp.eq.s32.totalorder %s21, 0
      %p110 = por %p108, %p109
      %p111 = scmp.ne.s32.totalorder %s97, %s98
      %p112 = scmp.eq.s32.totalorder %s22, 1
      %p113 = por %p111, %p112
      %p115 = scmp.ne.s32.totalorder %s98, %s114
      %p116 = scmp.eq.s32.totalorder %s22, 0
      %p117 = por %p115, %p116
      %p118 = scmp.le.s32.totalorder 1, %s16
      %p119 = scmp.lt.s32.totalorder %s16, 3
      %p120 = pnand %p118, %p119
      %p121 = pneg %p120
      // Predicated region
      $region9: #{tpu_custom_call.1} parent=5 // pred_check
        _
      $region10: #{tpu_custom_call.1} parent=5 // pred_check_branch
        %123 = sbr.rel (%p120) target = $region12
      $region11: #{tpu_custom_call.1} parent=5 // pred_region
        %s124 = ssub.s32 %s16, 1
        // Predicated region
        $region13: #{tpu_custom_call.1} parent=11 // pred_check
          %p125 = pneg %p63
        $region14: #{tpu_custom_call.1} parent=11 // pred_check_branch
          %127 = sbr.rel (%p125) target = $region16
        $region15: #{tpu_custom_call.1} parent=11 // pred_region
          %s129 = ssub.s32 16, 16
          %130 = vsyncadd [#allocation6], %s129
          %s132 = sshll.u32 [#allocation5], 4
          %s133 = int_to_ptr.vmem [resolvable:$true] %s132
          %135 = dma.hbm_to_vmem [thread:$0]  %s1, 16, %s133, [#allocation6]
        $region16: #{tpu_custom_call.1} parent=11 // pred_fallthru
          _
        // Predicated region
        $region17: #{tpu_custom_call.1} parent=11 // pred_check
          %p136 = pneg %p84
        $region18: #{tpu_custom_call.1} parent=11 // pred_check_branch
          %138 = sbr.rel (%p136) target = $region20
        $region19: #{tpu_custom_call.1} parent=11 // pred_region
          %s140 = ssub.s32 16, 16
          %141 = vsyncadd [#allocation6], %s140
          %s143 = sshll.u32 [#allocation7], 4
          %s144 = int_to_ptr.vmem [resolvable:$true] %s143
          %146 = dma.hbm_to_vmem [thread:$0]  %s2, 16, %s144, [#allocation6]
        $region20: #{tpu_custom_call.1} parent=11 // pred_fallthru
          _
      $region12: #{tpu_custom_call.1} parent=5 // pred_fallthru
        _
      %p147 = scmp.lt.s32.totalorder %s16, 2
      // Predicated region
      $region21: #{tpu_custom_call.1} parent=5 // pred_check
        %p148 = pneg %p147
      $region22: #{tpu_custom_call.1} parent=5 // pred_check_branch
        %150 = sbr.rel (%p148) target = $region24
      $region23: #{tpu_custom_call.1} parent=5 // pred_region
        // Predicated region
        $region25: #{tpu_custom_call.1} parent=23 // pred_check
          %p151 = pneg %p36
        $region26: #{tpu_custom_call.1} parent=23 // pred_check_branch
          %153 = sbr.rel (%p151) target = $region28
        $region27: #{tpu_custom_call.1} parent=23 // pred_region
          %s154 = sand.u32 %s26, 1
          %s155 = scalar_lea.sflag [#allocation3], %s154
          %s156 = sand.u32 %s26, 1
          %s157 = smul.addr %s156, 8
          %s158 = scalar_lea.vmem [#allocation2], %s157
          %s160 = ssub.s32 128, 128
          %161 = vsyncadd %s155, %s160
          %s162 = smul.addr %s16, 128
          %s163 = scalar_lea.hbm %s0, %s162
          %s165 = sshll.u32 %s158, 4
          %s166 = int_to_ptr.vmem [resolvable:$true] %s165
          %168 = dma.hbm_to_vmem [thread:$0]  %s163, 128, %s166, %s155
        $region28: #{tpu_custom_call.1} parent=23 // pred_fallthru
          _
      $region24: #{tpu_custom_call.1} parent=5 // pred_fallthru
        _
      %p169 = scmp.le.s32.totalorder 1, %s16
      %p170 = scmp.lt.s32.totalorder %s16, 3
      %p171 = pnand %p169, %p170
      %p172 = pneg %p171
      // Predicated region
      $region29: #{tpu_custom_call.1} parent=5 // pred_check
        _
      $region30: #{tpu_custom_call.1} parent=5 // pred_check_branch
        %174 = sbr.rel (%p171) target = $region32
      $region31: #{tpu_custom_call.1} parent=5 // pred_region
        %s175 = ssub.s32 %s16, 1
        %s176 = sand.u32 %s29, 1
        %s177 = scalar_lea.sflag [#allocation3], %s176
        %s178 = sand.u32 %s29, 1
        %s179 = smul.addr %s178, 8
        %s180 = scalar_lea.vmem [#allocation2], %s179
        // Predicated region
        $region33: #{tpu_custom_call.1} parent=31 // pred_check
          %p181 = pneg %p42
        $region34: #{tpu_custom_call.1} parent=31 // pred_check_branch
          %183 = sbr.rel (%p181) target = $region36
        $region35: #{tpu_custom_call.1} parent=31 // pred_region
          %184 = dma.done %s177, 128
        $region36: #{tpu_custom_call.1} parent=31 // pred_fallthru
          _
        // Predicated region
        $region37: #{tpu_custom_call.1} parent=31 // pred_check
          %p185 = pneg %p63
        $region38: #{tpu_custom_call.1} parent=31 // pred_check_branch
          %187 = sbr.rel (%p185) target = $region40
        $region39: #{tpu_custom_call.1} parent=31 // pred_region
          %188 = dma.done [#allocation6], 16
        $region40: #{tpu_custom_call.1} parent=31 // pred_fallthru
          _
        // Predicated region
        $region41: #{tpu_custom_call.1} parent=31 // pred_check
          %p189 = pneg %p84
        $region42: #{tpu_custom_call.1} parent=31 // pred_check_branch
          %191 = sbr.rel (%p189) target = $region44
        $region43: #{tpu_custom_call.1} parent=31 // pred_region
          %192 = dma.done [#allocation6], 16
        $region44: #{tpu_custom_call.1} parent=31 // pred_fallthru
          _
        %s193 = sand.u32 %s29, 1
        %s194 = scalar_lea.sflag [#allocation3], %s193
        %s195 = sand.u32 %s29, 1
        %s196 = smul.addr %s195, 8
        %s197 = scalar_lea.vmem [#allocation2], %s196
        %p198 = pneg %p42
        %p199 = pneg %p39
        %p200 = pneg %p63
        %p201 = pneg %p60
        %p202 = pneg %p84
        %p203 = pneg %p81
        %p204 = pneg %p110
        %p205 = pneg %p107
        %s206 = sand.u32 %s97, 1
        %s207 = scalar_lea.sflag [#allocation4], %s206
        %s208 = sand.u32 %s97, 1
        %s209 = smul.addr %s208, 8
        %s210 = scalar_lea.vmem [#allocation8], %s209
        %v211 = vld [vmem:[%s180] sm:$0xff]
        %v212 = vld [vmem:[#allocation5] sm:$0x1]
        %v213 = vld [vmem:[#allocation7] sm:$0x1]
        %vm214 = vcmask 261120
        %v215 = vsel %vm214, %v211, 0.0
        %216 = vadd.xlane.f32.xlu0 %v215
        %v217 = vpop.xlane.xlu0 %216
        %v218 = vrcp.pop 32.0
        %v219 = vmul.f32 %v217, %v218
        %v220 = vsub.f32 %v211, %v219
        %v221 = vmul.f32 %v220, %v220
        %v222 = vsel %vm214, %v221, 0.0
        %223 = vadd.xlane.f32.xlu0 %v222
        %v224 = vpop.xlane.xlu0 %223
        %v225 = vmul.f32 %v224, %v218
        %v226 = vadd.f32 %v225, 1e-12
        %v227 = vrsqrt.pop %v226
        %v228 = vmul.f32 %v220, %v227
        %v230 = vlaneseq
        %v231 = vshrl.u32 %v230, 7
        %v232 = vsub.s32 0, %v231
        %v233 = vrot.slane %v212, %v232
        %v235 = vmul.f32 %v228, %v233
        %v237 = vlaneseq
        %v238 = vshrl.u32 %v237, 7
        %v239 = vsub.s32 0, %v238
        %v240 = vrot.slane %v213, %v239
        %v242 = vadd.f32 %v235, %v240
        %243 = vst.msk [vmem:[%s210] sm:$0xff] %vm214, %v242
        %s244 = sand.u32 %s97, 1
        %s245 = scalar_lea.sflag [#allocation4], %s244
        %s246 = sand.u32 %s97, 1
        %s247 = smul.addr %s246, 8
        %s248 = scalar_lea.vmem [#allocation8], %s247
        // Predicated region
        $region45: #{tpu_custom_call.1} parent=31 // pred_check
          %p249 = pneg %p107
        $region46: #{tpu_custom_call.1} parent=31 // pred_check_branch
          %251 = sbr.rel (%p249) target = $region48
        $region47: #{tpu_custom_call.1} parent=31 // pred_region
          %s253 = ssub.s32 128, 128
          %254 = vsyncadd %s245, %s253
          %s255 = smul.addr %s21, 128
          %s256 = scalar_lea.hbm %s3, %s255
          %s258 = sshll.u32 %s248, 4
          %s259 = int_to_ptr.vmem [resolvable:$true] %s258
          %261 = dma.vmem_to_hbm [thread:$0]  %s259, 128, %s256, %s245
        $region48: #{tpu_custom_call.1} parent=31 // pred_fallthru
          _
      $region32: #{tpu_custom_call.1} parent=5 // pred_fallthru
        _
      %p262 = scmp.le.s32.totalorder 2, %s16
      // Predicated region
      $region49: #{tpu_custom_call.1} parent=5 // pred_check
        %p263 = pneg %p262
      $region50: #{tpu_custom_call.1} parent=5 // pred_check_branch
        %265 = sbr.rel (%p263) target = $region52
      $region51: #{tpu_custom_call.1} parent=5 // pred_region
        %s266 = ssub.s32 %s16, 2
        // Predicated region
        $region53: #{tpu_custom_call.1} parent=51 // pred_check
          %p267 = pneg %p113
        $region54: #{tpu_custom_call.1} parent=51 // pred_check_branch
          %269 = sbr.rel (%p267) target = $region56
        $region55: #{tpu_custom_call.1} parent=51 // pred_region
          %s270 = sand.u32 %s98, 1
          %s271 = scalar_lea.sflag [#allocation4], %s270
          %s272 = sand.u32 %s98, 1
          %s273 = smul.addr %s272, 8
          %s274 = scalar_lea.vmem [#allocation8], %s273
          %275 = dma.done %s271, 128
        $region56: #{tpu_custom_call.1} parent=51 // pred_fallthru
          _
      $region52: #{tpu_custom_call.1} parent=5 // pred_fallthru
        _
    $region6: #{tpu_custom_call.1} parent=1 // loop_footer
      %s20 = sadd.s32 1, %s16
    $region7: #{tpu_custom_call.1} parent=1 // loop_footer_branch
      %15 = sbr.rel target = $region3
    $region8: #{tpu_custom_call.1} parent=1 // loop_exit
      _
    %276 = vsyncpa [#allocation3], 1
    %s277 = scalar_lea.sflag [#allocation3], 1
    %278 = vsyncpa %s277, 1
    %279 = vsyncpa [#allocation6], 1
    %280 = vsyncpa [#allocation4], 1
    %s281 = scalar_lea.sflag [#allocation4], 1
    %282 = vsyncpa %s281, 1

</llo_original>
